<compile_context>
chip_gen: v7x
topology: tpu7x:2x2x1
jax: 0.10.0
libtpu: 0.0.40
codegen_flags: <defaults>
</compile_context>

<pallas_src>
import functools

import jax
import jax.numpy as jnp
from jax.experimental import pallas as pl
from jax.experimental.pallas import tpu as pltpu


def _round_up(v, m):
    return ((v + m - 1) // m) * m


# ----------------------------------------------------------------------------
# Pallas kernel: fused ChebNet forward (inference mode)
# ----------------------------------------------------------------------------
def chebnet_kernel(x_ref, L_ref, w1_ref, b1_ref, w2_ref, b2_ref, out_ref, *,
                   num_classes, h_pad, c_pad):
    x = x_ref[...]                      # [NR, FP]   bf16
    L = L_ref[...]                      # [NR, NR]   bf16  (scaled Laplacian)

    # ---- ChebConv layer 1 (K=2):  h = x@W0 + (L@x)@W1 + b -------------------
    #      computed as  [P0|P1] = x @ [W0|W1] ;  h = P0 + L@P1 + b
    P = jnp.dot(x, w1_ref[...], preferred_element_type=jnp.float32)   # [NR, 2HP]
    P0 = P[:, :h_pad]                                                  # vreg slice
    P1 = P[:, h_pad:].astype(jnp.bfloat16)
    h = P0 + jnp.dot(L, P1, preferred_element_type=jnp.float32) + b1_ref[...]
    h = jnp.maximum(h, 0.0)                                            # ReLU

    # TODO(synk): F.dropout is identity in eval mode; training-mode dropout
    # would need pltpu.prng_seed / prng_random_bits masking inside the kernel.

    # ---- ChebConv layer 2 (K=2):  z = h@W0 + (L@h)@W1 + b -------------------
    hb = h.astype(jnp.bfloat16)
    Q = jnp.dot(hb, w2_ref[...], preferred_element_type=jnp.float32)   # [NR, 2CP]
    Q0 = Q[:, :c_pad]
    Q1 = Q[:, c_pad:].astype(jnp.bfloat16)
    z = Q0 + jnp.dot(L, Q1, preferred_element_type=jnp.float32) + b2_ref[...]

    # ---- log_softmax over the *valid* class lanes (padding masked) ----------
    lane = jax.lax.broadcasted_iota(jnp.int32, z.shape, 1)
    valid = lane < num_classes
    zm = jnp.where(valid, z, jnp.float32(-1e30))
    m = jnp.max(zm, axis=1, keepdims=True)
    e = jnp.exp(zm - m)                                                # pad -> 0
    lse = jnp.log(jnp.sum(e, axis=1, keepdims=True))
    out_ref[...] = z - m - lse


# ----------------------------------------------------------------------------
# Packing (run ONCE per graph / params — hoisted out of the forward path)
# ----------------------------------------------------------------------------
def pack_inputs(x, L_hat, params):
    N, F = x.shape
    H = params["w01"].shape[1]
    C = params["w02"].shape[1]
    NR = _round_up(N, 8)        # sublane multiple only — no need for 128 here
    FP = _round_up(F, 128)
    HP = _round_up(H, 128)
    CP = _round_up(C, 128)

    def pad_bf16(a, rows, cols):
        out = jnp.zeros((rows, cols), jnp.bfloat16)
        return out.at[:a.shape[0], :a.shape[1]].set(a.astype(jnp.bfloat16))

    x_p = pad_bf16(x, NR, FP)                                        # [NR, FP]
    L_p = pad_bf16(L_hat, NR, NR)                                    # [NR, NR]
    # Fuse the K=2 Chebyshev weights along the OUTPUT dim: [W0 | W1].
    w1_cat = jnp.concatenate([pad_bf16(params["w01"], FP, HP),
                              pad_bf16(params["w11"], FP, HP)], axis=1)  # [FP, 2HP]
    w2_cat = jnp.concatenate([pad_bf16(params["w02"], HP, CP),
                              pad_bf16(params["w12"], HP, CP)], axis=1)  # [HP, 2CP]
    b1_p = jnp.zeros((1, HP), jnp.float32).at[:, :H].set(params["b1"])
    b2_p = jnp.zeros((1, CP), jnp.float32).at[:, :C].set(params["b2"])
    return (x_p, L_p, w1_cat, b1_p, w2_cat, b2_p)


# ----------------------------------------------------------------------------
# Forward: one pallas_call over the pre-packed operands
# ----------------------------------------------------------------------------
def make_chebnet_forward(num_nodes, num_features, hidden, num_classes):
    N, F, H, C = num_nodes, num_features, hidden, num_classes
    NR = _round_up(N, 8)
    FP = _round_up(F, 128)
    HP = _round_up(H, 128)
    CP = _round_up(C, 128)

    full = lambda shape: pl.BlockSpec(shape, lambda i: (0,) * len(shape))

    kernel = functools.partial(chebnet_kernel, num_classes=C, h_pad=HP, c_pad=CP)

    call = pl.pallas_call(
        kernel,
        out_shape=jax.ShapeDtypeStruct((NR, CP), jnp.float32),
        grid=(1,),
        in_specs=[
            full((NR, FP)),        # x
            full((NR, NR)),        # L_hat (scaled Laplacian)
            full((FP, 2 * HP)),    # [W0 | W1] layer 1
            full((1, HP)),         # bias layer 1 (f32)
            full((HP, 2 * CP)),    # [W0 | W1] layer 2
            full((1, CP)),         # bias layer 2 (f32)
        ],
        out_specs=full((NR, CP)),
        compiler_params=pltpu.CompilerParams(
            dimension_semantics=("arbitrary",),
            vmem_limit_bytes=32 * 1024 * 1024),
    )

    @jax.jit
    def forward(x_p, L_p, w1_cat, b1_p, w2_cat, b2_p):
        out_p = call(x_p, L_p, w1_cat, b1_p, w2_cat, b2_p)
        return out_p[:N, :C]

    return forward


def chebnet_forward(x, L_hat, params):
    """Module-equivalent one-shot forward.  For repeated calls, hoist
    pack_inputs / make_chebnet_forward out of the loop (as done in __main__)."""
    N, F = x.shape
    H = params["w01"].shape[1]
    C = params["w02"].shape[1]
    fwd = make_chebnet_forward(N, F, H, C)
    return fwd(*pack_inputs(x, L_hat, params))


# ----------------------------------------------------------------------------
# Plain-JAX glue: graph normalization, parameter init, f32 reference
# ----------------------------------------------------------------------------
def scaled_laplacian_dense(edge_index, num_nodes):
    """PyG ChebConv norm (sym, lambda_max=2.0):  L_hat = -D^{-1/2} A D^{-1/2}."""
    src, dst = edge_index
    A = jnp.zeros((num_nodes, num_nodes), jnp.float32)
    A = A.at[src, dst].set(1.0)
    A = A.at[dst, src].set(1.0)                       # undirected
    A = A * (1.0 - jnp.eye(num_nodes))                # remove self loops
    deg = jnp.sum(A, axis=1)
    dinv = jnp.where(deg > 0, 1.0 / jnp.sqrt(deg), 0.0)
    A_hat = dinv[:, None] * A * dinv[None, :]
    return -A_hat


def glorot(key, shape):
    fan_in, fan_out = shape
    lim = jnp.sqrt(6.0 / (fan_in + fan_out))
    return jax.random.uniform(key, shape, jnp.float32, -lim, lim)


def init_params(key, num_features, hidden, num_classes):
    k = jax.random.split(key, 4)
    return {
        "w01": glorot(k[0], (num_features, hidden)),
        "w11": glorot(k[1], (num_features, hidden)),
        "b1":  jnp.zeros((1, hidden), jnp.float32),
        "w02": glorot(k[2], (hidden, num_classes)),
        "w12": glorot(k[3], (hidden, num_classes)),
        "b2":  jnp.zeros((1, num_classes), jnp.float32),
    }


def chebnet_reference(x, L_hat, params):
    Lx = L_hat @ x
    h = jnp.maximum(x @ params["w01"] + Lx @ params["w11"] + params["b1"], 0.0)
    Lh = L_hat @ h
    z = h @ params["w02"] + Lh @ params["w12"] + params["b2"]
    return jax.nn.log_softmax(z, axis=1)


if __name__ == "__main__":
    key = jax.random.PRNGKey(0)
    N, F, H, C = 64, 16, 32, 8                        # nodes, features, hidden, classes

    kx, kp, _ = jax.random.split(key, 3)
    x = jax.random.normal(kx, (N, F), jnp.float32)

    # deterministic small graph: ring + a few chords
    src = jnp.concatenate([jnp.arange(N), jnp.arange(0, N, 4)])
    dst = jnp.concatenate([(jnp.arange(N) + 1) % N, (jnp.arange(0, N, 4) + 7) % N])
    edge_index = jnp.stack([src, dst])

    L_hat = scaled_laplacian_dense(edge_index, N)
    params = init_params(kp, F, H, C)

    # Packing hoisted out of the forward path (once per graph / params).
    packed = jax.block_until_ready(pack_inputs(x, L_hat, params))
    forward = make_chebnet_forward(N, F, H, C)

    out = forward(*packed)
    jax.block_until_ready(out)

    # sanity: shape, log-softmax rows sum to 1 in prob space, close to f32 ref
    assert out.shape == (N, C)
    probs = jnp.exp(out)
    assert bool(jnp.all(jnp.abs(jnp.sum(probs, axis=1) - 1.0) < 1e-3))
    ref = chebnet_reference(x, L_hat, params)
    assert bool(jnp.max(jnp.abs(out - ref)) < 0.25)   # bf16 matmuls, f32 accumulation

    print("KERNEL_OK")
</pallas_src>

<mosaic_0001>
module attributes {stable_mosaic.version = 11 : i64} {
  func.func @chebnet_kernel(%arg0: i32, %arg1: memref<64x128xbf16, #tpu.memory_space<vmem>>, %arg2: memref<64x64xbf16, #tpu.memory_space<vmem>>, %arg3: memref<128x256xbf16, #tpu.memory_space<vmem>>, %arg4: memref<1x128xf32, #tpu.memory_space<vmem>>, %arg5: memref<128x256xbf16, #tpu.memory_space<vmem>>, %arg6: memref<1x128xf32, #tpu.memory_space<vmem>>, %arg7: memref<64x128xf32, #tpu.memory_space<vmem>>) attributes {dimension_semantics = [#tpu.dimension_semantics<arbitrary>], iteration_bounds = array<i64: 1>, scalar_prefetch = 0 : i64, scratch_operands = 0 : i64, tpu.core_type = #tpu.core_type<tc>, window_params = [{pipeline_mode = #tpu.pipeline_mode<synchronous>, transform_indices = @transform_0, window_bounds = array<i64: 64, 128>}, {pipeline_mode = #tpu.pipeline_mode<synchronous>, transform_indices = @transform_1, window_bounds = array<i64: 64, 64>}, {pipeline_mode = #tpu.pipeline_mode<synchronous>, transform_indices = @transform_2, window_bounds = array<i64: 128, 256>}, {pipeline_mode = #tpu.pipeline_mode<synchronous>, transform_indices = @transform_3, window_bounds = array<i64: 1, 128>}, {pipeline_mode = #tpu.pipeline_mode<synchronous>, transform_indices = @transform_4, window_bounds = array<i64: 128, 256>}, {pipeline_mode = #tpu.pipeline_mode<synchronous>, transform_indices = @transform_5, window_bounds = array<i64: 1, 128>}, {pipeline_mode = #tpu.pipeline_mode<synchronous>, transform_indices = @transform_6, window_bounds = array<i64: 64, 128>}]} {
    %c0 = arith.constant 0 : index
    %c0_0 = arith.constant 0 : index
    %0 = vector.load %arg1[%c0, %c0_0] : memref<64x128xbf16, #tpu.memory_space<vmem>>, vector<64x128xbf16>
    %c0_1 = arith.constant 0 : index
    %c0_2 = arith.constant 0 : index
    %1 = vector.load %arg2[%c0_1, %c0_2] : memref<64x64xbf16, #tpu.memory_space<vmem>>, vector<64x64xbf16>
    %c0_3 = arith.constant 0 : index
    %c0_4 = arith.constant 0 : index
    %2 = vector.load %arg3[%c0_3, %c0_4] : memref<128x256xbf16, #tpu.memory_space<vmem>>, vector<128x256xbf16>
    %cst = arith.constant dense<0.000000e+00> : vector<64x256xf32>
    %3 = tpu.matmul %0, %2, %cst {dimension_numbers = #tpu.dot_dimension_numbers<[1], [0], [0], [1], [0, 0, 1, 1], [], []>} : vector<64x128xbf16>, vector<128x256xbf16>, vector<64x256xf32> -> vector<64x256xf32>
    %4 = vector.extract_strided_slice %3 {offsets = [0, 0], sizes = [64, 128], strides = [1, 1]} : vector<64x256xf32> to vector<64x128xf32>
    %5 = vector.extract_strided_slice %3 {offsets = [0, 128], sizes = [64, 128], strides = [1, 1]} : vector<64x256xf32> to vector<64x128xf32>
    %6 = arith.truncf %5 : vector<64x128xf32> to vector<64x128xbf16>
    %cst_5 = arith.constant dense<0.000000e+00> : vector<64x128xf32>
    %7 = tpu.matmul %1, %6, %cst_5 {dimension_numbers = #tpu.dot_dimension_numbers<[1], [0], [0], [1], [0, 0, 1, 1], [], []>} : vector<64x64xbf16>, vector<64x128xbf16>, vector<64x128xf32> -> vector<64x128xf32>
    %8 = arith.addf %4, %7 : vector<64x128xf32>
    %c0_6 = arith.constant 0 : index
    %c0_7 = arith.constant 0 : index
    %9 = vector.load %arg4[%c0_6, %c0_7] : memref<1x128xf32, #tpu.memory_space<vmem>>, vector<1x128xf32>
    %10 = vector.broadcast %9 : vector<1x128xf32> to vector<64x128xf32>
    %11 = arith.addf %8, %10 : vector<64x128xf32>
    %cst_8 = arith.constant 0.000000e+00 : f32
    %12 = vector.broadcast %cst_8 : f32 to vector<64x128xf32>
    %13 = arith.maximumf %11, %12 : vector<64x128xf32>
    %14 = arith.truncf %13 : vector<64x128xf32> to vector<64x128xbf16>
    %c0_9 = arith.constant 0 : index
    %c0_10 = arith.constant 0 : index
    %15 = vector.load %arg5[%c0_9, %c0_10] : memref<128x256xbf16, #tpu.memory_space<vmem>>, vector<128x256xbf16>
    %cst_11 = arith.constant dense<0.000000e+00> : vector<64x256xf32>
    %16 = tpu.matmul %14, %15, %cst_11 {dimension_numbers = #tpu.dot_dimension_numbers<[1], [0], [0], [1], [0, 0, 1, 1], [], []>} : vector<64x128xbf16>, vector<128x256xbf16>, vector<64x256xf32> -> vector<64x256xf32>
    %17 = vector.extract_strided_slice %16 {offsets = [0, 0], sizes = [64, 128], strides = [1, 1]} : vector<64x256xf32> to vector<64x128xf32>
    %18 = vector.extract_strided_slice %16 {offsets = [0, 128], sizes = [64, 128], strides = [1, 1]} : vector<64x256xf32> to vector<64x128xf32>
    %19 = arith.truncf %18 : vector<64x128xf32> to vector<64x128xbf16>
    %cst_12 = arith.constant dense<0.000000e+00> : vector<64x128xf32>
    %20 = tpu.matmul %1, %19, %cst_12 {dimension_numbers = #tpu.dot_dimension_numbers<[1], [0], [0], [1], [0, 0, 1, 1], [], []>} : vector<64x64xbf16>, vector<64x128xbf16>, vector<64x128xf32> -> vector<64x128xf32>
    %21 = arith.addf %17, %20 : vector<64x128xf32>
    %c0_13 = arith.constant 0 : index
    %c0_14 = arith.constant 0 : index
    %22 = vector.load %arg6[%c0_13, %c0_14] : memref<1x128xf32, #tpu.memory_space<vmem>>, vector<1x128xf32>
    %23 = vector.broadcast %22 : vector<1x128xf32> to vector<64x128xf32>
    %24 = arith.addf %21, %23 : vector<64x128xf32>
    %25 = tpu.iota {dimensions = array<i32: 1>} : vector<64x128xi32>
    %c8_i32 = arith.constant 8 : i32
    %26 = vector.broadcast %c8_i32 : i32 to vector<64x128xi32>
    %27 = arith.cmpi slt, %25, %26 : vector<64x128xi32>
    %cst_15 = arith.constant -1.000000e+30 : f32
    %28 = vector.broadcast %cst_15 : f32 to vector<64x128xf32>
    %29 = arith.select %27, %24, %28 : vector<64x128xi1>, vector<64x128xf32>
    %cst_16 = arith.constant dense<0xFF800000> : vector<64xf32>
    %30 = vector.multi_reduction <maximumf>, %29, %cst_16 [1] : vector<64x128xf32> to vector<64xf32>
    %31 = vector.shape_cast %30 : vector<64xf32> to vector<64x1xf32>
    %32 = vector.broadcast %31 : vector<64x1xf32> to vector<64x128xf32>
    %33 = arith.subf %29, %32 : vector<64x128xf32>
    %34 = math.exp %33 : vector<64x128xf32>
    %cst_17 = arith.constant dense<0.000000e+00> : vector<64xf32>
    %35 = vector.multi_reduction <add>, %34, %cst_17 [1] : vector<64x128xf32> to vector<64xf32>
    %36 = vector.shape_cast %35 : vector<64xf32> to vector<64x1xf32>
    %37 = math.log %36 : vector<64x1xf32>
    %38 = vector.broadcast %31 : vector<64x1xf32> to vector<64x128xf32>
    %39 = arith.subf %24, %38 : vector<64x128xf32>
    %40 = vector.broadcast %37 : vector<64x1xf32> to vector<64x128xf32>
    %41 = arith.subf %39, %40 : vector<64x128xf32>
    %c0_18 = arith.constant 0 : index
    %c0_19 = arith.constant 0 : index
    %42 = vector.load %arg7[%c0_18, %c0_19] : memref<64x128xf32, #tpu.memory_space<vmem>>, vector<64x128xf32>
    tpu.vector_store %arg7[%c0_18, %c0_19], %41 {strides = array<i32>} : memref<64x128xf32, #tpu.memory_space<vmem>>, vector<64x128xf32>,
    return
  }
  func.func @transform_0(%arg0: i32) -> (i32, i32) {
    %c0_i32 = arith.constant 0 : i32
    %c0_i32_0 = arith.constant 0 : i32
    %c0_i32_1 = arith.constant 0 : i32
    return %c0_i32, %c0_i32_0 : i32, i32
  }
  func.func @transform_1(%arg0: i32) -> (i32, i32) {
    %c0_i32 = arith.constant 0 : i32
    %c0_i32_0 = arith.constant 0 : i32
    %c0_i32_1 = arith.constant 0 : i32
    return %c0_i32, %c0_i32_0 : i32, i32
  }
  func.func @transform_2(%arg0: i32) -> (i32, i32) {
    %c0_i32 = arith.constant 0 : i32
    %c0_i32_0 = arith.constant 0 : i32
    %c0_i32_1 = arith.constant 0 : i32
    return %c0_i32, %c0_i32_0 : i32, i32
  }
  func.func @transform_3(%arg0: i32) -> (i32, i32) {
    %c0_i32 = arith.constant 0 : i32
    %c0_i32_0 = arith.constant 0 : i32
    %c0_i32_1 = arith.constant 0 : i32
    return %c0_i32, %c0_i32_0 : i32, i32
  }
  func.func @transform_4(%arg0: i32) -> (i32, i32) {
    %c0_i32 = arith.constant 0 : i32
    %c0_i32_0 = arith.constant 0 : i32
    %c0_i32_1 = arith.constant 0 : i32
    return %c0_i32, %c0_i32_0 : i32, i32
  }
  func.func @transform_5(%arg0: i32) -> (i32, i32) {
    %c0_i32 = arith.constant 0 : i32
    %c0_i32_0 = arith.constant 0 : i32
    %c0_i32_1 = arith.constant 0 : i32
    return %c0_i32, %c0_i32_0 : i32, i32
  }
  func.func @transform_6(%arg0: i32) -> (i32, i32) {
    %c0_i32 = arith.constant 0 : i32
    %c0_i32_0 = arith.constant 0 : i32
    %c0_i32_1 = arith.constant 0 : i32
    return %c0_i32, %c0_i32_0 : i32, i32
  }
}

</mosaic_0001>

<llo_original>
// kernel: forward.1
$region0: #{forward.1}
  #allocation0 [shape = 'u32[]', space=smem, size = 0x4, offset = 0x4, fixed_abs, tag = 'smem constant byte address 0x4 - core index']
  #allocation1 [shape = 'u32[144,128]{1,0:T(1,128)}', space=vmem, size = 0x12000, scoped, tag = 'internal scratch']
  %s0 = inlined_call_operand.hbm [shape: bf16[64,128], index: 0, kind: input, shape index: {}]
  %s1 = inlined_call_operand.hbm [shape: bf16[64,64], index: 1, kind: input, shape index: {}]
  %s2 = inlined_call_operand.hbm [shape: bf16[128,256], index: 2, kind: input, shape index: {}]
  %s3 = inlined_call_operand.vmem [shape: f32[1,128], index: 3, kind: input, shape index: {}]
  %s4 = inlined_call_operand.hbm [shape: bf16[128,256], index: 4, kind: input, shape index: {}]
  %s5 = inlined_call_operand.vmem [shape: f32[1,128], index: 5, kind: input, shape index: {}]
  %s6 = inlined_call_operand.vmem [shape: f32[64,128], index: 6, kind: output, shape index: {}]
  %s7 = sld [smem:[#allocation0]]
  $region50: #{forward.1} parent=0
    _
  %s9 = ssub.s32 1, %s7
  %s10 = scalar_select 0, %s9, %s7
  $region1: #{forward.1} parent=0
    #allocation2 [shape = 'u8[16384]{0}', space=vmem, size = 0x4000, scoped, tag = 'input window, operand 0, single buffered']
    #allocation3 [shape = 's32[1]{0}', space=sflag, size = 0x4, scoped, tag = 'scoped memory for forward.1']
    #allocation4 [shape = 'u8[16384]{0}', space=vmem, size = 0x4000, scoped, tag = 'input window, operand 1, single buffered']
    #allocation5 [shape = 's32[1]{0}', space=sflag, size = 0x4, scoped, tag = 'scoped memory for forward.1']
    #allocation6 [shape = 'u8[65536]{0}', space=vmem, size = 0x10000, scoped, tag = 'input window, operand 2, single buffered']
    #allocation7 [shape = 'u8[65536]{0}', space=vmem, size = 0x10000, scoped, tag = 'input window, operand 4, single buffered']
    #allocation8 [shape = 's32[1]{0}', space=sflag, size = 0x4, scoped, tag = 'scoped memory for forward.1']
    %11 = vsyncpa [#allocation3], 0
    %12 = vsyncpa [#allocation5], 0
    %13 = vsyncpa [#allocation8], 0
    // Predicated region
    $region2: #{forward.1} parent=1 // pred_check
      _
    $region3: #{forward.1} parent=1 // pred_check_branch
      %15 = sbr.rel (0) target = $region5
    $region4: #{forward.1} parent=1 // pred_region
      %s17 = ssub.s32 512, 512
      %18 = vsyncadd [#allocation3], %s17
      %s19 = sshll.u32 [#allocation2], 4
      %s20 = int_to_ptr.vmem [resolvable:$true] %s19
      %25 = dma.hbm_to_vmem [thread:$0]  %s0, 512, %s20, [#allocation3], 64, 64, 4
    $region5: #{forward.1} parent=1 // pred_fallthru
      _
    // Predicated region
    $region6: #{forward.1} parent=1 // pred_check
      _
    $region7: #{forward.1} parent=1 // pred_check_branch
      %27 = sbr.rel (0) target = $region9
    $region8: #{forward.1} parent=1 // pred_region
      %s29 = ssub.s32 512, 512
      %30 = vsyncadd [#allocation5], %s29
      %s31 = sshll.u32 [#allocation4], 4
      %s32 = int_to_ptr.vmem [resolvable:$true] %s31
      %37 = dma.hbm_to_vmem [thread:$0]  %s1, 512, %s32, [#allocation5], 64, 64, 4
    $region9: #{forward.1} parent=1 // pred_fallthru
      _
    // Predicated region
    $region10: #{forward.1} parent=1 // pred_check
      _
    $region11: #{forward.1} parent=1 // pred_check_branch
      %39 = sbr.rel (0) target = $region13
    $region12: #{forward.1} parent=1 // pred_region
      %s41 = ssub.s32 2048, 2048
      %42 = vsyncadd [#allocation5], %s41
      %s43 = sshll.u32 [#allocation6], 4
      %s44 = int_to_ptr.vmem [resolvable:$true] %s43
      %49 = dma.hbm_to_vmem [thread:$0]  %s2, 2048, %s44, [#allocation5], 128, 128, 8
    $region13: #{forward.1} parent=1 // pred_fallthru
      _
    // Predicated region
    $region14: #{forward.1} parent=1 // pred_check
      _
    $region15: #{forward.1} parent=1 // pred_check_branch
      %51 = sbr.rel (0) target = $region17
    $region16: #{forward.1} parent=1 // pred_region
      _
    $region17: #{forward.1} parent=1 // pred_fallthru
      _
    // Predicated region
    $region18: #{forward.1} parent=1 // pred_check
      _
    $region19: #{forward.1} parent=1 // pred_check_branch
      %53 = sbr.rel (0) target = $region21
    $region20: #{forward.1} parent=1 // pred_region
      %s55 = ssub.s32 2048, 2048
      %56 = vsyncadd [#allocation8], %s55
      %s57 = sshll.u32 [#allocation7], 4
      %s58 = int_to_ptr.vmem [resolvable:$true] %s57
      %63 = dma.hbm_to_vmem [thread:$0]  %s4, 2048, %s58, [#allocation8], 128, 128, 8
    $region21: #{forward.1} parent=1 // pred_fallthru
      _
    // Predicated region
    $region22: #{forward.1} parent=1 // pred_check
      _
    $region23: #{forward.1} parent=1 // pred_check_branch
      %65 = sbr.rel (0) target = $region25
    $region24: #{forward.1} parent=1 // pred_region
      _
    $region25: #{forward.1} parent=1 // pred_fallthru
      _
    // Predicated region
    $region26: #{forward.1} parent=1 // pred_check
      _
    $region27: #{forward.1} parent=1 // pred_check_branch
      %67 = sbr.rel (0) target = $region29
    $region28: #{forward.1} parent=1 // pred_region
      %68 = dma.done [#allocation3], 512
    $region29: #{forward.1} parent=1 // pred_fallthru
      _
    // Predicated region
    $region30: #{forward.1} parent=1 // pred_check
      _
    $region31: #{forward.1} parent=1 // pred_check_branch
      %70 = sbr.rel (0) target = $region33
    $region32: #{forward.1} parent=1 // pred_region
      %71 = dma.done [#allocation5], 512
    $region33: #{forward.1} parent=1 // pred_fallthru
      _
    // Predicated region
    $region34: #{forward.1} parent=1 // pred_check
      _
    $region35: #{forward.1} parent=1 // pred_check_branch
      %73 = sbr.rel (0) target = $region37
    $region36: #{forward.1} parent=1 // pred_region
      %74 = dma.done [#allocation5], 2048
    $region37: #{forward.1} parent=1 // pred_fallthru
      _
    // Predicated region
    $region38: #{forward.1} parent=1 // pred_check
      _
    $region39: #{forward.1} parent=1 // pred_check_branch
      %76 = sbr.rel (0) target = $region41
    $region40: #{forward.1} parent=1 // pred_region
      %77 = dma.done [#allocation8], 2048
    $region41: #{forward.1} parent=1 // pred_fallthru
      _
    %v79 = vld [vmem:[#allocation2] sm:$0xf]
    %v80 = vld [vmem:[#allocation2 + $0x4] sm:$0xf]
    %v81 = vld [vmem:[#allocation2 + $0x8] sm:$0xf]
    %v82 = vld [vmem:[#allocation2 + $0xc] sm:$0xf]
    %v83 = vld [vmem:[#allocation2 + $0x10] sm:$0xf]
    %v84 = vld [vmem:[#allocation2 + $0x14] sm:$0xf]
    %v85 = vld [vmem:[#allocation2 + $0x18] sm:$0xf]
    %v86 = vld [vmem:[#allocation2 + $0x1c] sm:$0xf]
    %v87 = vld [vmem:[#allocation4] sm:$0xf]
    %v88 = vld [vmem:[#allocation4 + $0x4] sm:$0xf]
    %v89 = vld [vmem:[#allocation4 + $0x8] sm:$0xf]
    %v90 = vld [vmem:[#allocation4 + $0xc] sm:$0xf]
    %v91 = vld [vmem:[#allocation4 + $0x10] sm:$0xf]
    %v92 = vld [vmem:[#allocation4 + $0x14] sm:$0xf]
    %v93 = vld [vmem:[#allocation4 + $0x18] sm:$0xf]
    %v94 = vld [vmem:[#allocation4 + $0x1c] sm:$0xf]
    %v95 = vld [vmem:[#allocation6] sm:$0xff]
    %v96 = vld [vmem:[#allocation6 + $0x8] sm:$0xff]
    %v97 = vld [vmem:[#allocation6 + $0x10] sm:$0xff]
    %v98 = vld [vmem:[#allocation6 + $0x18] sm:$0xff]
    %v99 = vld [vmem:[#allocation6 + $0x20] sm:$0xff]
    %v100 = vld [vmem:[#allocation6 + $0x28] sm:$0xff]
    %v101 = vld [vmem:[#allocation6 + $0x30] sm:$0xff]
    %v102 = vld [vmem:[#allocation6 + $0x38] sm:$0xff]
    %v103 = vld [vmem:[#allocation6 + $0x40] sm:$0xff]
    %v104 = vld [vmem:[#allocation6 + $0x48] sm:$0xff]
    %v105 = vld [vmem:[#allocation6 + $0x50] sm:$0xff]
    %v106 = vld [vmem:[#allocation6 + $0x58] sm:$0xff]
    %v107 = vld [vmem:[#allocation6 + $0x60] sm:$0xff]
    %v108 = vld [vmem:[#allocation6 + $0x68] sm:$0xff]
    %v109 = vld [vmem:[#allocation6 + $0x70] sm:$0xff]
    %v110 = vld [vmem:[#allocation6 + $0x78] sm:$0xff]
    %v119 = vunpack.c.l.b16 %v79
    %v120 = vunpack.c.l.b16 %v80
    %v121 = vunpack.c.l.b16 %v81
    %v122 = vunpack.c.l.b16 %v82
    %v123 = vunpack.c.l.b16 %v83
    %v124 = vunpack.c.l.b16 %v84
    %v125 = vunpack.c.l.b16 %v85
    %v126 = vunpack.c.l.b16 %v86
    %v127 = vpack.c.b16 %v120, %v119
    %v128 = vpack.c.b16 %v122, %v121
    %v129 = vpack.c.b16 %v124, %v123
    %v130 = vpack.c.b16 %v126, %v125
    %v151 = vunpack.c.l.b16 %v95
    %v152 = vunpack.c.h.b16 %v95
    %v153 = vunpack.c.l.b16 %v96
    %v154 = vunpack.c.h.b16 %v96
    %v155 = vunpack.c.l.b16 %v97
    %v156 = vunpack.c.h.b16 %v97
    %v157 = vunpack.c.l.b16 %v98
    %v158 = vunpack.c.h.b16 %v98
    %v159 = vunpack.c.l.b16 %v99
    %v160 = vunpack.c.h.b16 %v99
    %v161 = vunpack.c.l.b16 %v100
    %v162 = vunpack.c.h.b16 %v100
    %v163 = vunpack.c.l.b16 %v101
    %v164 = vunpack.c.h.b16 %v101
    %v165 = vunpack.c.l.b16 %v102
    %v166 = vunpack.c.h.b16 %v102
    %v167 = vunpack.c.l.b16 %v103
    %v168 = vunpack.c.h.b16 %v103
    %v169 = vunpack.c.l.b16 %v104
    %v170 = vunpack.c.h.b16 %v104
    %v171 = vunpack.c.l.b16 %v105
    %v172 = vunpack.c.h.b16 %v105
    %v173 = vunpack.c.l.b16 %v106
    %v174 = vunpack.c.h.b16 %v106
    %v175 = vunpack.c.l.b16 %v107
    %v176 = vunpack.c.h.b16 %v107
    %v177 = vunpack.c.l.b16 %v108
    %v178 = vunpack.c.h.b16 %v108
    %v179 = vunpack.c.l.b16 %v109
    %v180 = vunpack.c.h.b16 %v109
    %v181 = vunpack.c.l.b16 %v110
    %v182 = vunpack.c.h.b16 %v110
    %v183 = vpack.c.b16 %v153, %v151
    %v184 = vpack.c.b16 %v154, %v152
    %v185 = vpack.c.b16 %v157, %v155
    %v186 = vpack.c.b16 %v158, %v156
    %v187 = vpack.c.b16 %v161, %v159
    %v188 = vpack.c.b16 %v162, %v160
    %v189 = vpack.c.b16 %v165, %v163
    %v190 = vpack.c.b16 %v166, %v164
    %v191 = vpack.c.b16 %v169, %v167
    %v192 = vpack.c.b16 %v170, %v168
    %v193 = vpack.c.b16 %v173, %v171
    %v194 = vpack.c.b16 %v174, %v172
    %v195 = vpack.c.b16 %v177, %v175
    %v196 = vpack.c.b16 %v178, %v176
    %v197 = vpack.c.b16 %v181, %v179
    %v198 = vpack.c.b16 %v182, %v180
    %215 = vmatprep.subr.bf16.mxu0 %v184
    %216 = vmatpush1.bf16.msra.mxu0 %v183
    %217 = vmatprep.subr.bf16.mxu0 %v186
    %218 = vmatpush1.bf16.msra.mxu0 %v185
    %219 = vmatprep.subr.bf16.mxu0 %v188
    %220 = vmatpush1.bf16.msra.mxu0 %v187
    %221 = vmatprep.subr.bf16.mxu0 %v190
    %222 = vmatpush1.bf16.msra.mxu0 %v189
    %223 = vmatprep.subr.bf16.mxu0 %v192
    %224 = vmatpush1.bf16.msra.mxu0 %v191
    %225 = vmatprep.subr.bf16.mxu0 %v194
    %226 = vmatpush1.bf16.msra.mxu0 %v193
    %227 = vmatprep.subr.bf16.mxu0 %v196
    %228 = vmatpush1.bf16.msra.mxu0 %v195
    %229 = vmatprep.subr.bf16.mxu0 %v198
    %230 = vmatpush1.bf16.msra.mxu0 %v197
    %231 = vmatprep.subr.bf16.mxu0 0
    %232 = vmatpush1.bf16.msra.mxu0 0
    %233 = vmatprep.subr.bf16.mxu0 0
    %234 = vmatpush1.bf16.msra.mxu0 0
    %235 = vmatprep.subr.bf16.mxu0 0
    %236 = vmatpush1.bf16.msra.mxu0 0
    %237 = vmatprep.subr.bf16.mxu0 0
    %238 = vmatpush1.bf16.msra.mxu0 0
    %239 = vmatprep.subr.bf16.mxu0 0
    %240 = vmatpush1.bf16.msra.mxu0 0
    %241 = vmatprep.subr.bf16.mxu0 0
    %242 = vmatpush1.bf16.msra.mxu0 0
    %243 = vmatprep.subr.bf16.mxu0 0
    %244 = vmatpush1.bf16.msra.mxu0 0
    %245 = vmatprep.subr.bf16.mxu0 0
    %246 = vmatpush1.bf16.msra.mxu0 0
    %247 = vmatprep.mubr.bf16.mxu0 0
    %248 = vmatmul.mubr.bf16.gmra.mrb[0].mxu0 %v127
    %v249 = vpop.f32.mrb[0].mxu0
    %v250 = vadd.f32 0.0, %v249
    %v251 = vpop.f32.mrb[0].mxu0
    %v252 = vadd.f32 0.0, %v251
    %v253 = vpop.f32.mrb[0].mxu0
    %v254 = vadd.f32 0.0, %v253
    %v255 = vpop.f32.mrb[0].mxu0
    %v256 = vadd.f32 0.0, %v255
    %257 = vmatprep.mubr.bf16.mxu0 0
    %258 = vmatmul.mubr.bf16.gmra.mrb[0].mxu0 %v128
    %v259 = vpop.f32.mrb[0].mxu0
    %v260 = vadd.f32 0.0, %v259
    %v261 = vpop.f32.mrb[0].mxu0
    %v262 = vadd.f32 0.0, %v261
    %v263 = vpop.f32.mrb[0].mxu0
    %v264 = vadd.f32 0.0, %v263
    %v265 = vpop.f32.mrb[0].mxu0
    %v266 = vadd.f32 0.0, %v265
    %267 = vmatprep.mubr.bf16.mxu0 0
    %268 = vmatmul.mubr.bf16.gmra.mrb[0].mxu0 %v129
    %v269 = vpop.f32.mrb[0].mxu0
    %v270 = vadd.f32 0.0, %v269
    %v271 = vpop.f32.mrb[0].mxu0
    %v272 = vadd.f32 0.0, %v271
    %v273 = vpop.f32.mrb[0].mxu0
    %v274 = vadd.f32 0.0, %v273
    %v275 = vpop.f32.mrb[0].mxu0
    %v276 = vadd.f32 0.0, %v275
    %277 = vmatprep.mubr.bf16.mxu0 0
    %278 = vmatmul.mubr.bf16.gmra.mrb[0].mxu0 %v130
    %v279 = vpop.f32.mrb[0].mxu0
    %v280 = vadd.f32 0.0, %v279
    %v281 = vpop.f32.mrb[0].mxu0
    %v282 = vadd.f32 0.0, %v281
    %v283 = vpop.f32.mrb[0].mxu0
    %v284 = vadd.f32 0.0, %v283
    %v285 = vpop.f32.mrb[0].mxu0
    %v286 = vadd.f32 0.0, %v285
    %287 = vdwg.mxu0
    %v288 = vpack.c.bf16 %v256, %v252
    %v289 = vpack.c.bf16 %v266, %v262
    %v290 = vpack.c.bf16 %v276, %v272
    %v291 = vpack.c.bf16 %v286, %v282
    %v300 = vunpack.c.l.b16 %v87
    %v301 = vunpack.c.l.b16 %v88
    %v302 = vunpack.c.l.b16 %v89
    %v303 = vunpack.c.l.b16 %v90
    %v304 = vunpack.c.l.b16 %v91
    %v305 = vunpack.c.l.b16 %v92
    %v306 = vunpack.c.l.b16 %v93
    %v307 = vunpack.c.l.b16 %v94
    %v308 = vpack.c.b16 %v301, %v300
    %v309 = vpack.c.b16 %v303, %v302
    %v310 = vpack.c.b16 %v305, %v304
    %v311 = vpack.c.b16 %v307, %v306
    %vm312 = vcmask 523264
    %v314 = vsel %vm312, %v308, 0
    %v317 = vsel %vm312, %v309, 0
    %v320 = vsel %vm312, %v310, 0
    %v323 = vsel %vm312, %v311, 0
    %325 = vmatprep.subr.bf16.mxu0 0
    %326 = vmatpush1.bf16.msra.mxu0 %v288
    %327 = vmatprep.subr.bf16.mxu0 0
    %328 = vmatpush1.bf16.msra.mxu0 %v289
    %329 = vmatprep.subr.bf16.mxu0 0
    %330 = vmatpush1.bf16.msra.mxu0 %v290
    %331 = vmatprep.subr.bf16.mxu0 0
    %332 = vmatpush1.bf16.msra.mxu0 %v291
    %333 = vmatprep.subr.bf16.mxu0 0
    %334 = vmatpush1.bf16.msra.mxu0 0
    %335 = vmatprep.subr.bf16.mxu0 0
    %336 = vmatpush1.bf16.msra.mxu0 0
    %337 = vmatprep.subr.bf16.mxu0 0
    %338 = vmatpush1.bf16.msra.mxu0 0
    %339 = vmatprep.subr.bf16.mxu0 0
    %340 = vmatpush1.bf16.msra.mxu0 0
    %341 = vmatprep.subr.bf16.mxu0 0
    %342 = vmatpush1.bf16.msra.mxu0 0
    %343 = vmatprep.subr.bf16.mxu0 0
    %344 = vmatpush1.bf16.msra.mxu0 0
    %345 = vmatprep.subr.bf16.mxu0 0
    %346 = vmatpush1.bf16.msra.mxu0 0
    %347 = vmatprep.subr.bf16.mxu0 0
    %348 = vmatpush1.bf16.msra.mxu0 0
    %349 = vmatprep.subr.bf16.mxu0 0
    %350 = vmatpush1.bf16.msra.mxu0 0
    %351 = vmatprep.subr.bf16.mxu0 0
    %352 = vmatpush1.bf16.msra.mxu0 0
    %353 = vmatprep.subr.bf16.mxu0 0
    %354 = vmatpush1.bf16.msra.mxu0 0
    %355 = vmatprep.subr.bf16.mxu0 0
    %356 = vmatpush1.bf16.msra.mxu0 0
    %357 = vmatprep.mubr.bf16.mxu0 0
    %358 = vmatmul.mubr.bf16.gmra.mrb[0].mxu0 %v314
    %v359 = vpop.f32.mrb[0].mxu0
    %v360 = vadd.f32 0.0, %v359
    %v361 = vpop.f32.mrb[0].mxu0
    %v362 = vpop.f32.mrb[0].mxu0
    %v363 = vadd.f32 0.0, %v362
    %v364 = vpop.f32.mrb[0].mxu0
    %365 = vmatprep.mubr.bf16.mxu0 0
    %366 = vmatmul.mubr.bf16.gmra.mrb[0].mxu0 %v317
    %v367 = vpop.f32.mrb[0].mxu0
    %v368 = vadd.f32 0.0, %v367
    %v369 = vpop.f32.mrb[0].mxu0
    %v370 = vpop.f32.mrb[0].mxu0
    %v371 = vadd.f32 0.0, %v370
    %v372 = vpop.f32.mrb[0].mxu0
    %373 = vmatprep.mubr.bf16.mxu0 0
    %374 = vmatmul.mubr.bf16.gmra.mrb[0].mxu0 %v320
    %v375 = vpop.f32.mrb[0].mxu0
    %v376 = vadd.f32 0.0, %v375
    %v377 = vpop.f32.mrb[0].mxu0
    %v378 = vpop.f32.mrb[0].mxu0
    %v379 = vadd.f32 0.0, %v378
    %v380 = vpop.f32.mrb[0].mxu0
    %381 = vmatprep.mubr.bf16.mxu0 0
    %382 = vmatmul.mubr.bf16.gmra.mrb[0].mxu0 %v323
    %v383 = vpop.f32.mrb[0].mxu0
    %v384 = vadd.f32 0.0, %v383
    %v385 = vpop.f32.mrb[0].mxu0
    %v386 = vpop.f32.mrb[0].mxu0
    %v387 = vadd.f32 0.0, %v386
    %v388 = vpop.f32.mrb[0].mxu0
    %389 = vdwg.mxu0
    %v390 = vadd.f32 %v250, %v360
    %v391 = vadd.f32 %v254, %v363
    %v392 = vadd.f32 %v260, %v368
    %v393 = vadd.f32 %v264, %v371
    %v394 = vadd.f32 %v270, %v376
    %v395 = vadd.f32 %v274, %v379
    %v396 = vadd.f32 %v280, %v384
    %v397 = vadd.f32 %v284, %v387
    %v398 = vld [vmem:[%s3] sm:$0x1]
    %v400 = vlaneseq
    %v401 = vshrl.u32 %v400, 7
    %v402 = vsub.s32 0, %v401
    %v403 = vrot.slane %v398, %v402
    %v405 = vadd.f32 %v390, %v403
    %v406 = vadd.f32 %v391, %v403
    %v407 = vadd.f32 %v392, %v403
    %v408 = vadd.f32 %v393, %v403
    %v409 = vadd.f32 %v394, %v403
    %v410 = vadd.f32 %v395, %v403
    %v411 = vadd.f32 %v396, %v403
    %v412 = vadd.f32 %v397, %v403
    %v413 = vmax.f32 %v405, 0.0
    %v414 = vmax.f32 %v406, 0.0
    %v415 = vmax.f32 %v407, 0.0
    %v416 = vmax.f32 %v408, 0.0
    %v417 = vmax.f32 %v409, 0.0
    %v418 = vmax.f32 %v410, 0.0
    %v419 = vmax.f32 %v411, 0.0
    %v420 = vmax.f32 %v412, 0.0
    %v421 = vpack.c.bf16 %v414, %v413
    %v422 = vpack.c.bf16 %v416, %v415
    %v423 = vpack.c.bf16 %v418, %v417
    %v424 = vpack.c.bf16 %v420, %v419
    %v425 = vld [vmem:[#allocation7] sm:$0xff]
    %v426 = vld [vmem:[#allocation7 + $0x8] sm:$0xff]
    %v427 = vld [vmem:[#allocation7 + $0x10] sm:$0xff]
    %v428 = vld [vmem:[#allocation7 + $0x18] sm:$0xff]
    %v429 = vld [vmem:[#allocation7 + $0x20] sm:$0xff]
    %v430 = vld [vmem:[#allocation7 + $0x28] sm:$0xff]
    %v431 = vld [vmem:[#allocation7 + $0x30] sm:$0xff]
    %v432 = vld [vmem:[#allocation7 + $0x38] sm:$0xff]
    %v433 = vld [vmem:[#allocation7 + $0x40] sm:$0xff]
    %v434 = vld [vmem:[#allocation7 + $0x48] sm:$0xff]
    %v435 = vld [vmem:[#allocation7 + $0x50] sm:$0xff]
    %v436 = vld [vmem:[#allocation7 + $0x58] sm:$0xff]
    %v437 = vld [vmem:[#allocation7 + $0x60] sm:$0xff]
    %v438 = vld [vmem:[#allocation7 + $0x68] sm:$0xff]
    %v439 = vld [vmem:[#allocation7 + $0x70] sm:$0xff]
    %v440 = vld [vmem:[#allocation7 + $0x78] sm:$0xff]
    %v457 = vunpack.c.l.b16 %v425
    %v458 = vunpack.c.h.b16 %v425
    %v459 = vunpack.c.l.b16 %v426
    %v460 = vunpack.c.h.b16 %v426
    %v461 = vunpack.c.l.b16 %v427
    %v462 = vunpack.c.h.b16 %v427
    %v463 = vunpack.c.l.b16 %v428
    %v464 = vunpack.c.h.b16 %v428
    %v465 = vunpack.c.l.b16 %v429
    %v466 = vunpack.c.h.b16 %v429
    %v467 = vunpack.c.l.b16 %v430
    %v468 = vunpack.c.h.b16 %v430
    %v469 = vunpack.c.l.b16 %v431
    %v470 = vunpack.c.h.b16 %v431
    %v471 = vunpack.c.l.b16 %v432
    %v472 = vunpack.c.h.b16 %v432
    %v473 = vunpack.c.l.b16 %v433
    %v474 = vunpack.c.h.b16 %v433
    %v475 = vunpack.c.l.b16 %v434
    %v476 = vunpack.c.h.b16 %v434
    %v477 = vunpack.c.l.b16 %v435
    %v478 = vunpack.c.h.b16 %v435
    %v479 = vunpack.c.l.b16 %v436
    %v480 = vunpack.c.h.b16 %v436
    %v481 = vunpack.c.l.b16 %v437
    %v482 = vunpack.c.h.b16 %v437
    %v483 = vunpack.c.l.b16 %v438
    %v484 = vunpack.c.h.b16 %v438
    %v485 = vunpack.c.l.b16 %v439
    %v486 = vunpack.c.h.b16 %v439
    %v487 = vunpack.c.l.b16 %v440
    %v488 = vunpack.c.h.b16 %v440
    %v489 = vpack.c.b16 %v459, %v457
    %v490 = vpack.c.b16 %v460, %v458
    %v491 = vpack.c.b16 %v463, %v461
    %v492 = vpack.c.b16 %v464, %v462
    %v493 = vpack.c.b16 %v467, %v465
    %v494 = vpack.c.b16 %v468, %v466
    %v495 = vpack.c.b16 %v471, %v469
    %v496 = vpack.c.b16 %v472, %v470
    %v497 = vpack.c.b16 %v475, %v473
    %v498 = vpack.c.b16 %v476, %v474
    %v499 = vpack.c.b16 %v479, %v477
    %v500 = vpack.c.b16 %v480, %v478
    %v501 = vpack.c.b16 %v483, %v481
    %v502 = vpack.c.b16 %v484, %v482
    %v503 = vpack.c.b16 %v487, %v485
    %v504 = vpack.c.b16 %v488, %v486
    %521 = vmatprep.subr.bf16.mxu0 %v490
    %522 = vmatpush1.bf16.msra.mxu0 %v489
    %523 = vmatprep.subr.bf16.mxu0 %v492
    %524 = vmatpush1.bf16.msra.mxu0 %v491
    %525 = vmatprep.subr.bf16.mxu0 %v494
    %526 = vmatpush1.bf16.msra.mxu0 %v493
    %527 = vmatprep.subr.bf16.mxu0 %v496
    %528 = vmatpush1.bf16.msra.mxu0 %v495
    %529 = vmatprep.subr.bf16.mxu0 %v498
    %530 = vmatpush1.bf16.msra.mxu0 %v497
    %531 = vmatprep.subr.bf16.mxu0 %v500
    %532 = vmatpush1.bf16.msra.mxu0 %v499
    %533 = vmatprep.subr.bf16.mxu0 %v502
    %534 = vmatpush1.bf16.msra.mxu0 %v501
    %535 = vmatprep.subr.bf16.mxu0 %v504
    %536 = vmatpush1.bf16.msra.mxu0 %v503
    %537 = vmatprep.subr.bf16.mxu0 0
    %538 = vmatpush1.bf16.msra.mxu0 0
    %539 = vmatprep.subr.bf16.mxu0 0
    %540 = vmatpush1.bf16.msra.mxu0 0
    %541 = vmatprep.subr.bf16.mxu0 0
    %542 = vmatpush1.bf16.msra.mxu0 0
    %543 = vmatprep.subr.bf16.mxu0 0
    %544 = vmatpush1.bf16.msra.mxu0 0
    %545 = vmatprep.subr.bf16.mxu0 0
    %546 = vmatpush1.bf16.msra.mxu0 0
    %547 = vmatprep.subr.bf16.mxu0 0
    %548 = vmatpush1.bf16.msra.mxu0 0
    %549 = vmatprep.subr.bf16.mxu0 0
    %550 = vmatpush1.bf16.msra.mxu0 0
    %551 = vmatprep.subr.bf16.mxu0 0
    %552 = vmatpush1.bf16.msra.mxu0 0
    %553 = vmatprep.mubr.bf16.mxu0 0
    %554 = vmatmul.mubr.bf16.gmra.mrb[0].mxu0 %v421
    %v555 = vpop.f32.mrb[0].mxu0
    %v556 = vadd.f32 0.0, %v555
    %v557 = vpop.f32.mrb[0].mxu0
    %v558 = vadd.f32 0.0, %v557
    %v559 = vpop.f32.mrb[0].mxu0
    %v560 = vadd.f32 0.0, %v559
    %v561 = vpop.f32.mrb[0].mxu0
    %v562 = vadd.f32 0.0, %v561
    %563 = vmatprep.mubr.bf16.mxu0 0
    %564 = vmatmul.mubr.bf16.gmra.mrb[0].mxu0 %v422
    %v565 = vpop.f32.mrb[0].mxu0
    %v566 = vadd.f32 0.0, %v565
    %v567 = vpop.f32.mrb[0].mxu0
    %v568 = vadd.f32 0.0, %v567
    %v569 = vpop.f32.mrb[0].mxu0
    %v570 = vadd.f32 0.0, %v569
    %v571 = vpop.f32.mrb[0].mxu0
    %v572 = vadd.f32 0.0, %v571
    %573 = vmatprep.mubr.bf16.mxu0 0
    %574 = vmatmul.mubr.bf16.gmra.mrb[0].mxu0 %v423
    %v575 = vpop.f32.mrb[0].mxu0
    %v576 = vadd.f32 0.0, %v575
    %v577 = vpop.f32.mrb[0].mxu0
    %v578 = vadd.f32 0.0, %v577
    %v579 = vpop.f32.mrb[0].mxu0
    %v580 = vadd.f32 0.0, %v579
    %v581 = vpop.f32.mrb[0].mxu0
    %v582 = vadd.f32 0.0, %v581
    %583 = vmatprep.mubr.bf16.mxu0 0
    %584 = vmatmul.mubr.bf16.gmra.mrb[0].mxu0 %v424
    %v585 = vpop.f32.mrb[0].mxu0
    %v586 = vadd.f32 0.0, %v585
    %v587 = vpop.f32.mrb[0].mxu0
    %v588 = vadd.f32 0.0, %v587
    %v589 = vpop.f32.mrb[0].mxu0
    %v590 = vadd.f32 0.0, %v589
    %v591 = vpop.f32.mrb[0].mxu0
    %v592 = vadd.f32 0.0, %v591
    %593 = vdwg.mxu0
    %v594 = vpack.c.bf16 %v562, %v558
    %v595 = vpack.c.bf16 %v572, %v568
    %v596 = vpack.c.bf16 %v582, %v578
    %v597 = vpack.c.bf16 %v592, %v588
    %598 = vmatprep.subr.bf16.mxu0 0
    %599 = vmatpush1.bf16.msra.mxu0 %v594
    %600 = vmatprep.subr.bf16.mxu0 0
    %601 = vmatpush1.bf16.msra.mxu0 %v595
    %602 = vmatprep.subr.bf16.mxu0 0
    %603 = vmatpush1.bf16.msra.mxu0 %v596
    %604 = vmatprep.subr.bf16.mxu0 0
    %605 = vmatpush1.bf16.msra.mxu0 %v597
    %606 = vmatprep.subr.bf16.mxu0 0
    %607 = vmatpush1.bf16.msra.mxu0 0
    %608 = vmatprep.subr.bf16.mxu0 0
    %609 = vmatpush1.bf16.msra.mxu0 0
    %610 = vmatprep.subr.bf16.mxu0 0
    %611 = vmatpush1.bf16.msra.mxu0 0
    %612 = vmatprep.subr.bf16.mxu0 0
    %613 = vmatpush1.bf16.msra.mxu0 0
    %614 = vmatprep.subr.bf16.mxu0 0
    %615 = vmatpush1.bf16.msra.mxu0 0
    %616 = vmatprep.subr.bf16.mxu0 0
    %617 = vmatpush1.bf16.msra.mxu0 0
    %618 = vmatprep.subr.bf16.mxu0 0
    %619 = vmatpush1.bf16.msra.mxu0 0
    %620 = vmatprep.subr.bf16.mxu0 0
    %621 = vmatpush1.bf16.msra.mxu0 0
    %622 = vmatprep.subr.bf16.mxu0 0
    %623 = vmatpush1.bf16.msra.mxu0 0
    %624 = vmatprep.subr.bf16.mxu0 0
    %625 = vmatpush1.bf16.msra.mxu0 0
    %626 = vmatprep.subr.bf16.mxu0 0
    %627 = vmatpush1.bf16.msra.mxu0 0
    %628 = vmatprep.subr.bf16.mxu0 0
    %629 = vmatpush1.bf16.msra.mxu0 0
    %630 = vmatprep.mubr.bf16.mxu0 0
    %631 = vmatmul.mubr.bf16.gmra.mrb[0].mxu0 %v314
    %v632 = vpop.f32.mrb[0].mxu0
    %v633 = vadd.f32 0.0, %v632
    %v634 = vpop.f32.mrb[0].mxu0
    %v635 = vpop.f32.mrb[0].mxu0
    %v636 = vadd.f32 0.0, %v635
    %v637 = vpop.f32.mrb[0].mxu0
    %638 = vmatprep.mubr.bf16.mxu0 0
    %639 = vmatmul.mubr.bf16.gmra.mrb[0].mxu0 %v317
    %v640 = vpop.f32.mrb[0].mxu0
    %v641 = vadd.f32 0.0, %v640
    %v642 = vpop.f32.mrb[0].mxu0
    %v643 = vpop.f32.mrb[0].mxu0
    %v644 = vadd.f32 0.0, %v643
    %v645 = vpop.f32.mrb[0].mxu0
    %646 = vmatprep.mubr.bf16.mxu0 0
    %647 = vmatmul.mubr.bf16.gmra.mrb[0].mxu0 %v320
    %v648 = vpop.f32.mrb[0].mxu0
    %v649 = vadd.f32 0.0, %v648
    %v650 = vpop.f32.mrb[0].mxu0
    %v651 = vpop.f32.mrb[0].mxu0
    %v652 = vadd.f32 0.0, %v651
    %v653 = vpop.f32.mrb[0].mxu0
    %654 = vmatprep.mubr.bf16.mxu0 0
    %655 = vmatmul.mubr.bf16.gmra.mrb[0].mxu0 %v323
    %v656 = vpop.f32.mrb[0].mxu0
    %v657 = vadd.f32 0.0, %v656
    %v658 = vpop.f32.mrb[0].mxu0
    %v659 = vpop.f32.mrb[0].mxu0
    %v660 = vadd.f32 0.0, %v659
    %v661 = vpop.f32.mrb[0].mxu0
    %662 = vdwg.mxu0
    %v663 = vadd.f32 %v556, %v633
    %v664 = vadd.f32 %v560, %v636
    %v665 = vadd.f32 %v566, %v641
    %v666 = vadd.f32 %v570, %v644
    %v667 = vadd.f32 %v576, %v649
    %v668 = vadd.f32 %v580, %v652
    %v669 = vadd.f32 %v586, %v657
    %v670 = vadd.f32 %v590, %v660
    %v671 = vld [vmem:[%s5] sm:$0x1]
    %v673 = vlaneseq
    %v674 = vshrl.u32 %v673, 7
    %v675 = vsub.s32 0, %v674
    %v676 = vrot.slane %v671, %v675
    %v678 = vadd.f32 %v663, %v676
    %v679 = vadd.f32 %v664, %v676
    %v680 = vadd.f32 %v665, %v676
    %v681 = vadd.f32 %v666, %v676
    %v682 = vadd.f32 %v667, %v676
    %v683 = vadd.f32 %v668, %v676
    %v684 = vadd.f32 %v669, %v676
    %v685 = vadd.f32 %v670, %v676
    %v686 = vlaneseq
    %v687 = vand.u32 %v686, 127
    %vm688 = vcmp.lt.s32.totalorder %v687, 8
    %v689 = vsel %vm688, %v678, -1e+30
    %v690 = vsel %vm688, %v679, -1e+30
    %v691 = vsel %vm688, %v680, -1e+30
    %v692 = vsel %vm688, %v681, -1e+30
    %v693 = vsel %vm688, %v682, -1e+30
    %v694 = vsel %vm688, %v683, -1e+30
    %v695 = vsel %vm688, %v684, -1e+30
    %v696 = vsel %vm688, %v685, -1e+30
    %697 = vmax.xlane.f32.xlu0 %v689
    %v698 = vpop.xlane.xlu0 %697
    %699 = vmax.xlane.f32.xlu0 %v690
    %v700 = vpop.xlane.xlu0 %699
    %701 = vmax.xlane.f32.xlu0 %v691
    %v702 = vpop.xlane.xlu0 %701
    %703 = vmax.xlane.f32.xlu0 %v692
    %v704 = vpop.xlane.xlu0 %703
    %705 = vmax.xlane.f32.xlu0 %v693
    %v706 = vpop.xlane.xlu0 %705
    %707 = vmax.xlane.f32.xlu0 %v694
    %v708 = vpop.xlane.xlu0 %707
    %709 = vmax.xlane.f32.xlu0 %v695
    %v710 = vpop.xlane.xlu0 %709
    %711 = vmax.xlane.f32.xlu0 %v696
    %v712 = vpop.xlane.xlu0 %711
    %v713 = vsub.f32 %v689, %v698
    %v714 = vsub.f32 %v690, %v700
    %v715 = vsub.f32 %v691, %v702
    %v716 = vsub.f32 %v692, %v704
    %v717 = vsub.f32 %v693, %v706
    %v718 = vsub.f32 %v694, %v708
    %v719 = vsub.f32 %v695, %v710
    %v720 = vsub.f32 %v696, %v712
    %v721 = vmul.f32 %v713, 1.442695
    %v722 = vpow.pop %v721
    %v723 = vmul.f32 %v714, 1.442695
    %v724 = vpow.pop %v723
    %v725 = vmul.f32 %v715, 1.442695
    %v726 = vpow.pop %v725
    %v727 = vmul.f32 %v716, 1.442695
    %v728 = vpow.pop %v727
    %v729 = vmul.f32 %v717, 1.442695
    %v730 = vpow.pop %v729
    %v731 = vmul.f32 %v718, 1.442695
    %v732 = vpow.pop %v731
    %v733 = vmul.f32 %v719, 1.442695
    %v734 = vpow.pop %v733
    %v735 = vmul.f32 %v720, 1.442695
    %v736 = vpow.pop %v735
    %737 = vadd.xlane.f32.xlu0 %v722
    %v738 = vpop.xlane.xlu0 %737
    %739 = vadd.xlane.f32.xlu0 %v724
    %v740 = vpop.xlane.xlu0 %739
    %741 = vadd.xlane.f32.xlu0 %v726
    %v742 = vpop.xlane.xlu0 %741
    %743 = vadd.xlane.f32.xlu0 %v728
    %v744 = vpop.xlane.xlu0 %743
    %745 = vadd.xlane.f32.xlu0 %v730
    %v746 = vpop.xlane.xlu0 %745
    %747 = vadd.xlane.f32.xlu0 %v732
    %v748 = vpop.xlane.xlu0 %747
    %749 = vadd.xlane.f32.xlu0 %v734
    %v750 = vpop.xlane.xlu0 %749
    %751 = vadd.xlane.f32.xlu0 %v736
    %v752 = vpop.xlane.xlu0 %751
    %v753 = vlog2.pop %v738
    %v754 = vmul.f32 %v753, 0.6931472
    %v755 = vlog2.pop %v740
    %v756 = vmul.f32 %v755, 0.6931472
    %v757 = vlog2.pop %v742
    %v758 = vmul.f32 %v757, 0.6931472
    %v759 = vlog2.pop %v744
    %v760 = vmul.f32 %v759, 0.6931472
    %v761 = vlog2.pop %v746
    %v762 = vmul.f32 %v761, 0.6931472
    %v763 = vlog2.pop %v748
    %v764 = vmul.f32 %v763, 0.6931472
    %v765 = vlog2.pop %v750
    %v766 = vmul.f32 %v765, 0.6931472
    %v767 = vlog2.pop %v752
    %v768 = vmul.f32 %v767, 0.6931472
    %v769 = vsub.f32 %v678, %v698
    %v770 = vsub.f32 %v679, %v700
    %v771 = vsub.f32 %v680, %v702
    %v772 = vsub.f32 %v681, %v704
    %v773 = vsub.f32 %v682, %v706
    %v774 = vsub.f32 %v683, %v708
    %v775 = vsub.f32 %v684, %v710
    %v776 = vsub.f32 %v685, %v712
    %v777 = vsub.f32 %v769, %v754
    %v778 = vsub.f32 %v770, %v756
    %v779 = vsub.f32 %v771, %v758
    %v780 = vsub.f32 %v772, %v760
    %v781 = vsub.f32 %v773, %v762
    %v782 = vsub.f32 %v774, %v764
    %v783 = vsub.f32 %v775, %v766
    %v784 = vsub.f32 %v776, %v768
    %785 = vst [vmem:[%s6] sm:$0xff] %v777
    %786 = vst [vmem:[%s6 + $0x8] sm:$0xff] %v778
    %787 = vst [vmem:[%s6 + $0x10] sm:$0xff] %v779
    %788 = vst [vmem:[%s6 + $0x18] sm:$0xff] %v780
    %789 = vst [vmem:[%s6 + $0x20] sm:$0xff] %v781
    %790 = vst [vmem:[%s6 + $0x28] sm:$0xff] %v782
    %791 = vst [vmem:[%s6 + $0x30] sm:$0xff] %v783
    %792 = vst [vmem:[%s6 + $0x38] sm:$0xff] %v784
    // Predicated region
    $region42: #{forward.1} parent=1 // pred_check
      _
    $region43: #{forward.1} parent=1 // pred_check_branch
      %794 = sbr.rel (0) target = $region45
    $region44: #{forward.1} parent=1 // pred_region
      _
    $region45: #{forward.1} parent=1 // pred_fallthru
      _
    // Predicated region
    $region46: #{forward.1} parent=1 // pred_check
      _
    $region47: #{forward.1} parent=1 // pred_check_branch
      %796 = sbr.rel (0) target = $region49
    $region48: #{forward.1} parent=1 // pred_region
      _
    $region49: #{forward.1} parent=1 // pred_fallthru
      _
    %797 = vsyncpa [#allocation3], 1
    %798 = vsyncpa [#allocation5], 1
    %799 = vsyncpa [#allocation8], 1

</llo_original>
